<compile_context>
chip_gen: v7x
topology: tpu7x:2x2x1
jax: 0.10.0
libtpu: 0.0.40
codegen_flags: <defaults>
</compile_context>

<pallas_src>
import functools

import jax
import jax.numpy as jnp
from jax.experimental import pallas as pl
from jax.experimental.pallas import tpu as pltpu

_NEG = -1e30  # finite "minus infinity": exp(_NEG - m) underflows to exactly 0 in f32


def _intention_kernel(score_ref, off_ref, m_ref, l_ref, ax_ref, ay_ref,
                      *, TH, W, H, tiles_per_split, needs_mask):
    """Per-column online-softmax soft-argmax over one (TB, TH, W) row tile.

    score_ref : (TB, TH, W)      score tile (native dtype)
    off_ref   : (TB, 2, TH, W)   offset tile, channel dim inside the block
    m_ref     : (1, TB, W)       per-column running max        (output partial)
    l_ref     : (1, TB, W)       per-column softmax denominator (output partial)
    ax_ref    : (1, TB, W)       per-column weighted-x accumulator
    ay_ref    : (1, TB, W)       per-column weighted-y accumulator
    """
    c_idx = pl.program_id(0)   # spatial split (megacore axis)
    s_idx = pl.program_id(2)   # row tile within split (innermost reduction axis)

    @pl.when(s_idx == 0)
    def _():
        m_ref[...] = jnp.full(m_ref.shape, _NEG, dtype=jnp.float32)
        l_ref[...] = jnp.zeros(l_ref.shape, dtype=jnp.float32)
        ax_ref[...] = jnp.zeros(ax_ref.shape, dtype=jnp.float32)
        ay_ref[...] = jnp.zeros(ay_ref.shape, dtype=jnp.float32)

    s = score_ref[...].astype(jnp.float32)          # (TB, TH, W)
    offx = off_ref[:, 0].astype(jnp.float32)        # (TB, TH, W) static slice
    offy = off_ref[:, 1].astype(jnp.float32)

    # Grid coordinates: pure adds, no integer div/mod.
    row_base = (c_idx * tiles_per_split + s_idx) * TH
    rows = jax.lax.broadcasted_iota(jnp.int32, (TH, W), 0) + row_base
    gx = jax.lax.broadcasted_iota(jnp.int32, (TH, W), 1).astype(jnp.float32)
    gy = rows.astype(jnp.float32)

    if needs_mask:                                   # compiled only if H ragged
        valid = rows < H                             # (TH, W)
        s = jnp.where(valid[None], s, _NEG)

    m_old = m_ref[0]                                 # (TB, W)
    m_new = jnp.maximum(m_old, jnp.max(s, axis=1))   # sublane reduce only
    alpha = jnp.exp(m_old - m_new)                   # (TB, W)
    p = jnp.exp(s - m_new[:, None, :])               # (TB, TH, W); masked rows -> 0

    cx = p * (gx[None] + offx)
    cy = p * (gy[None] + offy)
    if needs_mask:
        # Out-of-bounds rows may contain stale/garbage offsets (even NaN) —
        # p is exactly 0 there, but 0*NaN = NaN, so mask the contributions.
        cx = jnp.where(valid[None], cx, 0.0)
        cy = jnp.where(valid[None], cy, 0.0)

    m_ref[0] = m_new
    l_ref[0] = alpha * l_ref[0] + jnp.sum(p, axis=1)
    ax_ref[0] = alpha * ax_ref[0] + jnp.sum(cx, axis=1)
    ay_ref[0] = alpha * ay_ref[0] + jnp.sum(cy, axis=1)


def intention_sampler(pix_score, pix_offset, *, batch_tile=None,
                      spatial_splits=None, max_rows_per_tile=None,
                      vmem_budget_bytes=24 * 1024 * 1024):
    """pix_score: (B,1,H,W), pix_offset: (B,2,H,W) -> ((B,2) points, (B,1) max score)."""
    B, c1, H, W = pix_score.shape
    assert c1 == 1 and pix_offset.shape == (B, 2, H, W)

    TB = B if batch_tile is None else batch_tile
    assert B % TB == 0 and (TB == B or TB % 8 == 0), \
        "batch_tile must divide B and be either B or a multiple of 8"
    batch_blocks = B // TB

    # v7x megacore: if the batch axis has a single block, split the spatial
    # reduction across two parallel grid slots so both TensorCores stream.
    splits = spatial_splits
    if splits is None:
        splits = 2 if batch_blocks == 1 else 1

    score_bytes = jnp.dtype(pix_score.dtype).itemsize
    off_bytes = jnp.dtype(pix_offset.dtype).itemsize

    # Row-tile size: biggest TH whose double-buffered input slabs fit the budget.
    bytes_per_row = TB * W * (score_bytes + 2 * off_bytes) * 2
    th_cap = max(8, int(vmem_budget_bytes // max(1, bytes_per_row)))
    if max_rows_per_tile is not None:
        th_cap = min(th_cap, max_rows_per_tile)
    target = min(H, th_cap, pl.cdiv(H, splits))
    if target >= H:
        TH = H                                    # full dim: always a legal block
    else:
        TH = max(8, (target // 8) * 8)            # sublane dim multiple of 8
        if TH >= H:
            TH = H

    total_tiles = pl.cdiv(H, TH)
    tiles_per_split = pl.cdiv(total_tiles, splits)
    needs_clamp = splits * tiles_per_split > total_tiles
    needs_mask = splits * tiles_per_split * TH != H

    def row_block(c, s):
        rb = c * tiles_per_split + s
        if needs_clamp:
            # Duplicate last tile for over-hanging slots; kernel masks it fully.
            rb = jnp.minimum(rb, total_tiles - 1)
        return rb

    score = pix_score.reshape(B, H, W)            # free: drop the size-1 channel

    kernel = functools.partial(
        _intention_kernel, TH=TH, W=W, H=H,
        tiles_per_split=tiles_per_split, needs_mask=needs_mask)

    out_spec = lambda: pl.BlockSpec((1, TB, W), lambda c, b, s: (c, b, 0))
    grid_spec = pltpu.PrefetchScalarGridSpec(
        num_scalar_prefetch=0,
        grid=(splits, batch_blocks, tiles_per_split),
        in_specs=[
            pl.BlockSpec((TB, TH, W), lambda c, b, s: (b, row_block(c, s), 0)),
            pl.BlockSpec((TB, 2, TH, W), lambda c, b, s: (b, 0, row_block(c, s), 0)),
        ],
        out_specs=[out_spec(), out_spec(), out_spec(), out_spec()],
    )

    part_shape = jax.ShapeDtypeStruct((splits, B, W), jnp.float32)
    cost = pl.CostEstimate(
        flops=12 * B * H * W,
        transcendentals=B * H * W,
        bytes_accessed=B * H * W * (score_bytes + 2 * off_bytes)
                       + 4 * splits * B * W * 4,
    )

    m_p, l_p, ax_p, ay_p = pl.pallas_call(
        kernel,
        out_shape=(part_shape, part_shape, part_shape, part_shape),
        grid_spec=grid_spec,
        compiler_params=pltpu.CompilerParams(
            dimension_semantics=("parallel", "parallel", "arbitrary")),
        cost_estimate=cost,
    )(score, pix_offset)

    # Tiny cross-column / cross-split combine (4 * splits * B * W floats).
    m_g = jnp.max(m_p, axis=(0, 2))                       # (B,)
    w = jnp.exp(m_p - m_g[None, :, None])                 # (S, B, W)
    l_g = jnp.sum(w * l_p, axis=(0, 2))                   # (B,)
    x = jnp.sum(w * ax_p, axis=(0, 2)) / l_g
    y = jnp.sum(w * ay_p, axis=(0, 2)) / l_g
    pts = jnp.stack([x, y], axis=-1)                      # (B, 2)
    msc = m_g[:, None]                                    # (B, 1)
    return pts, msc


def intention_sampler_ref(pix_score, pix_offset):
    """Pure-JAX reference of the same soft-argmax sampling."""
    B, _, H, W = pix_score.shape
    s = pix_score.reshape(B, -1).astype(jnp.float32)
    p = jax.nn.softmax(s, axis=-1)
    idx = jnp.arange(H * W)
    gx = (idx % W).astype(jnp.float32)
    gy = (idx // W).astype(jnp.float32)
    off = pix_offset.reshape(B, 2, -1).astype(jnp.float32)
    x = gx[None, :] + off[:, 0, :]
    y = gy[None, :] + off[:, 1, :]
    pts = jnp.stack([jnp.sum(p * x, axis=-1), jnp.sum(p * y, axis=-1)], axis=-1)
    msc = jnp.max(s, axis=-1, keepdims=True)
    return pts, msc


if __name__ == "__main__":
    key = jax.random.PRNGKey(0)

    def check(B, H, W, dtype=jnp.float32, atol=1e-3, **kw):
        k1, k2 = jax.random.split(jax.random.fold_in(key, 100000 * B + 100 * H + W))
        ps = jax.random.normal(k1, (B, 1, H, W)).astype(dtype)
        po = (0.5 * jax.random.normal(k2, (B, 2, H, W))).astype(dtype)
        pts, msc = intention_sampler(ps, po, **kw)
        jax.block_until_ready((pts, msc))
        pts_ref, msc_ref = intention_sampler_ref(ps, po)
        assert jnp.allclose(pts, pts_ref, atol=atol, rtol=1e-3), (pts, pts_ref)
        assert jnp.allclose(msc, msc_ref, atol=1e-5, rtol=1e-5), (msc, msc_ref)

    check(2, 16, 16)                            # clean tiling, 2 spatial splits
    check(3, 20, 20)                            # ragged H: masked tail + clamped dup tile
    check(2, 64, 64, max_rows_per_tile=8)       # multi-tile online-softmax path
    check(1, 20, 200)                           # B=1, wide W, masked tail
    check(2, 128, 128, spatial_splits=1)        # single split, whole image per step
    check(2, 24, 40, dtype=jnp.bfloat16)        # native bf16 inputs (halved HBM bytes)

    print("KERNEL_OK")
</pallas_src>

<mosaic_0001>
module attributes {stable_mosaic.version = 11 : i64} {
  func.func @_intention_kernel(%arg0: i32, %arg1: i32, %arg2: i32, %arg3: memref<2x8x16xf32, #tpu.memory_space<vmem>>, %arg4: memref<2x2x8x16xf32, #tpu.memory_space<vmem>>, %arg5: memref<1x2x16xf32, #tpu.memory_space<vmem>>, %arg6: memref<1x2x16xf32, #tpu.memory_space<vmem>>, %arg7: memref<1x2x16xf32, #tpu.memory_space<vmem>>, %arg8: memref<1x2x16xf32, #tpu.memory_space<vmem>>) attributes {dimension_semantics = [#tpu.dimension_semantics<parallel>, #tpu.dimension_semantics<parallel>, #tpu.dimension_semantics<arbitrary>], iteration_bounds = array<i64: 2, 1, 1>, scalar_prefetch = 0 : i64, scratch_operands = 0 : i64, tpu.core_type = #tpu.core_type<tc>, window_params = [{transform_indices = @transform_0, window_bounds = array<i64: 2, 8, 16>}, {transform_indices = @transform_1, window_bounds = array<i64: 2, 2, 8, 16>}, {transform_indices = @transform_2, window_bounds = array<i64: 1, 2, 16>}, {transform_indices = @transform_3, window_bounds = array<i64: 1, 2, 16>}, {transform_indices = @transform_4, window_bounds = array<i64: 1, 2, 16>}, {transform_indices = @transform_5, window_bounds = array<i64: 1, 2, 16>}]} {
    %c0_i32 = arith.constant 0 : i32
    %0 = arith.cmpi eq, %arg2, %c0_i32 : i32
    %1 = arith.extui %0 : i1 to i32
    %c0_i32_0 = arith.constant 0 : i32
    %2 = arith.cmpi ne, %1, %c0_i32_0 : i32
    scf.if %2 {
      %cst_37 = arith.constant -1.000000e+30 : f32
      %62 = vector.broadcast %cst_37 : f32 to vector<1x2x16xf32>
      %c0_38 = arith.constant 0 : index
      %c0_39 = arith.constant 0 : index
      %c0_40 = arith.constant 0 : index
      %63 = vector.load %arg5[%c0_38, %c0_39, %c0_40] : memref<1x2x16xf32, #tpu.memory_space<vmem>>, vector<1x2x16xf32>
      tpu.vector_store %arg5[%c0_38, %c0_39, %c0_40], %62 {strides = array<i32>} : memref<1x2x16xf32, #tpu.memory_space<vmem>>, vector<1x2x16xf32>,
      %cst_41 = arith.constant 0.000000e+00 : f32
      %64 = vector.broadcast %cst_41 : f32 to vector<1x2x16xf32>
      %c0_42 = arith.constant 0 : index
      %c0_43 = arith.constant 0 : index
      %c0_44 = arith.constant 0 : index
      %65 = vector.load %arg6[%c0_42, %c0_43, %c0_44] : memref<1x2x16xf32, #tpu.memory_space<vmem>>, vector<1x2x16xf32>
      tpu.vector_store %arg6[%c0_42, %c0_43, %c0_44], %64 {strides = array<i32>} : memref<1x2x16xf32, #tpu.memory_space<vmem>>, vector<1x2x16xf32>,
      %cst_45 = arith.constant 0.000000e+00 : f32
      %66 = vector.broadcast %cst_45 : f32 to vector<1x2x16xf32>
      %c0_46 = arith.constant 0 : index
      %c0_47 = arith.constant 0 : index
      %c0_48 = arith.constant 0 : index
      %67 = vector.load %arg7[%c0_46, %c0_47, %c0_48] : memref<1x2x16xf32, #tpu.memory_space<vmem>>, vector<1x2x16xf32>
      tpu.vector_store %arg7[%c0_46, %c0_47, %c0_48], %66 {strides = array<i32>} : memref<1x2x16xf32, #tpu.memory_space<vmem>>, vector<1x2x16xf32>,
      %cst_49 = arith.constant 0.000000e+00 : f32
      %68 = vector.broadcast %cst_49 : f32 to vector<1x2x16xf32>
      %c0_50 = arith.constant 0 : index
      %c0_51 = arith.constant 0 : index
      %c0_52 = arith.constant 0 : index
      %69 = vector.load %arg8[%c0_50, %c0_51, %c0_52] : memref<1x2x16xf32, #tpu.memory_space<vmem>>, vector<1x2x16xf32>
      tpu.vector_store %arg8[%c0_50, %c0_51, %c0_52], %68 {strides = array<i32>} : memref<1x2x16xf32, #tpu.memory_space<vmem>>, vector<1x2x16xf32>,
    } else {
    }
    %c0 = arith.constant 0 : index
    %c0_1 = arith.constant 0 : index
    %c0_2 = arith.constant 0 : index
    %3 = vector.load %arg3[%c0, %c0_1, %c0_2] : memref<2x8x16xf32, #tpu.memory_space<vmem>>, vector<2x8x16xf32>
    %c0_3 = arith.constant 0 : index
    %c0_4 = arith.constant 0 : index
    %c0_5 = arith.constant 0 : index
    %c0_6 = arith.constant 0 : index
    %4 = vector.load %arg4[%c0_3, %c0_4, %c0_5, %c0_6] : memref<2x2x8x16xf32, #tpu.memory_space<vmem>>, vector<2x1x8x16xf32>
    %5 = vector.shape_cast %4 : vector<2x1x8x16xf32> to vector<2x8x16xf32>
    %c0_7 = arith.constant 0 : index
    %c1 = arith.constant 1 : index
    %c0_8 = arith.constant 0 : index
    %c0_9 = arith.constant 0 : index
    %6 = vector.load %arg4[%c0_7, %c1, %c0_8, %c0_9] : memref<2x2x8x16xf32, #tpu.memory_space<vmem>>, vector<2x1x8x16xf32>
    %7 = vector.shape_cast %6 : vector<2x1x8x16xf32> to vector<2x8x16xf32>
    %c1_i32 = arith.constant 1 : i32
    %8 = arith.muli %arg0, %c1_i32 : i32
    %9 = arith.addi %8, %arg2 : i32
    %c8_i32 = arith.constant 8 : i32
    %10 = arith.muli %9, %c8_i32 : i32
    %11 = tpu.iota {dimensions = array<i32: 0>} : vector<8x16xi32>
    %12 = vector.broadcast %10 : i32 to vector<8x16xi32>
    %13 = arith.addi %11, %12 : vector<8x16xi32>
    %14 = tpu.iota {dimensions = array<i32: 1>} : vector<8x16xi32>
    %15 = arith.sitofp %14 : vector<8x16xi32> to vector<8x16xf32>
    %16 = arith.sitofp %13 : vector<8x16xi32> to vector<8x16xf32>
    %c0_10 = arith.constant 0 : index
    %c0_11 = arith.constant 0 : index
    %c0_12 = arith.constant 0 : index
    %17 = vector.load %arg5[%c0_10, %c0_11, %c0_12] : memref<1x2x16xf32, #tpu.memory_space<vmem>>, vector<1x2x16xf32>
    %18 = vector.shape_cast %17 : vector<1x2x16xf32> to vector<2x16xf32>
    %cst = arith.constant dense<0xFF800000> : vector<2x16xf32>
    %19 = vector.multi_reduction <maximumf>, %3, %cst [1] : vector<2x8x16xf32> to vector<2x16xf32>
    %20 = arith.maximumf %18, %19 : vector<2x16xf32>
    %21 = arith.subf %18, %20 : vector<2x16xf32>
    %22 = math.exp %21 : vector<2x16xf32>
    %23 = vector.shape_cast %20 : vector<2x16xf32> to vector<2x1x16xf32>
    %24 = vector.broadcast %23 : vector<2x1x16xf32> to vector<2x8x16xf32>
    %25 = arith.subf %3, %24 : vector<2x8x16xf32>
    %26 = math.exp %25 : vector<2x8x16xf32>
    %27 = vector.shape_cast %15 : vector<8x16xf32> to vector<1x8x16xf32>
    %28 = vector.broadcast %27 : vector<1x8x16xf32> to vector<2x8x16xf32>
    %29 = arith.addf %28, %5 : vector<2x8x16xf32>
    %30 = arith.mulf %26, %29 : vector<2x8x16xf32>
    %31 = vector.shape_cast %16 : vector<8x16xf32> to vector<1x8x16xf32>
    %32 = vector.broadcast %31 : vector<1x8x16xf32> to vector<2x8x16xf32>
    %33 = arith.addf %32, %7 : vector<2x8x16xf32>
    %34 = arith.mulf %26, %33 : vector<2x8x16xf32>
    %c0_13 = arith.constant 0 : index
    %c0_14 = arith.constant 0 : index
    %c0_15 = arith.constant 0 : index
    %35 = vector.load %arg5[%c0_13, %c0_14, %c0_15] : memref<1x2x16xf32, #tpu.memory_space<vmem>>, vector<1x2x16xf32>
    %36 = vector.shape_cast %35 : vector<1x2x16xf32> to vector<2x16xf32>
    %37 = vector.shape_cast %20 : vector<2x16xf32> to vector<1x2x16xf32>
    tpu.vector_store %arg5[%c0_13, %c0_14, %c0_15], %37 {strides = array<i32>} : memref<1x2x16xf32, #tpu.memory_space<vmem>>, vector<1x2x16xf32>,
    %c0_16 = arith.constant 0 : index
    %c0_17 = arith.constant 0 : index
    %c0_18 = arith.constant 0 : index
    %38 = vector.load %arg6[%c0_16, %c0_17, %c0_18] : memref<1x2x16xf32, #tpu.memory_space<vmem>>, vector<1x2x16xf32>
    %39 = vector.shape_cast %38 : vector<1x2x16xf32> to vector<2x16xf32>
    %40 = arith.mulf %22, %39 : vector<2x16xf32>
    %cst_19 = arith.constant dense<0.000000e+00> : vector<2x16xf32>
    %41 = vector.multi_reduction <add>, %26, %cst_19 [1] : vector<2x8x16xf32> to vector<2x16xf32>
    %42 = arith.addf %40, %41 : vector<2x16xf32>
    %c0_20 = arith.constant 0 : index
    %c0_21 = arith.constant 0 : index
    %c0_22 = arith.constant 0 : index
    %43 = vector.load %arg6[%c0_20, %c0_21, %c0_22] : memref<1x2x16xf32, #tpu.memory_space<vmem>>, vector<1x2x16xf32>
    %44 = vector.shape_cast %43 : vector<1x2x16xf32> to vector<2x16xf32>
    %45 = vector.shape_cast %42 : vector<2x16xf32> to vector<1x2x16xf32>
    tpu.vector_store %arg6[%c0_20, %c0_21, %c0_22], %45 {strides = array<i32>} : memref<1x2x16xf32, #tpu.memory_space<vmem>>, vector<1x2x16xf32>,
    %c0_23 = arith.constant 0 : index
    %c0_24 = arith.constant 0 : index
    %c0_25 = arith.constant 0 : index
    %46 = vector.load %arg7[%c0_23, %c0_24, %c0_25] : memref<1x2x16xf32, #tpu.memory_space<vmem>>, vector<1x2x16xf32>
    %47 = vector.shape_cast %46 : vector<1x2x16xf32> to vector<2x16xf32>
    %48 = arith.mulf %22, %47 : vector<2x16xf32>
    %cst_26 = arith.constant dense<0.000000e+00> : vector<2x16xf32>
    %49 = vector.multi_reduction <add>, %30, %cst_26 [1] : vector<2x8x16xf32> to vector<2x16xf32>
    %50 = arith.addf %48, %49 : vector<2x16xf32>
    %c0_27 = arith.constant 0 : index
    %c0_28 = arith.constant 0 : index
    %c0_29 = arith.constant 0 : index
    %51 = vector.load %arg7[%c0_27, %c0_28, %c0_29] : memref<1x2x16xf32, #tpu.memory_space<vmem>>, vector<1x2x16xf32>
    %52 = vector.shape_cast %51 : vector<1x2x16xf32> to vector<2x16xf32>
    %53 = vector.shape_cast %50 : vector<2x16xf32> to vector<1x2x16xf32>
    tpu.vector_store %arg7[%c0_27, %c0_28, %c0_29], %53 {strides = array<i32>} : memref<1x2x16xf32, #tpu.memory_space<vmem>>, vector<1x2x16xf32>,
    %c0_30 = arith.constant 0 : index
    %c0_31 = arith.constant 0 : index
    %c0_32 = arith.constant 0 : index
    %54 = vector.load %arg8[%c0_30, %c0_31, %c0_32] : memref<1x2x16xf32, #tpu.memory_space<vmem>>, vector<1x2x16xf32>
    %55 = vector.shape_cast %54 : vector<1x2x16xf32> to vector<2x16xf32>
    %56 = arith.mulf %22, %55 : vector<2x16xf32>
    %cst_33 = arith.constant dense<0.000000e+00> : vector<2x16xf32>
    %57 = vector.multi_reduction <add>, %34, %cst_33 [1] : vector<2x8x16xf32> to vector<2x16xf32>
    %58 = arith.addf %56, %57 : vector<2x16xf32>
    %c0_34 = arith.constant 0 : index
    %c0_35 = arith.constant 0 : index
    %c0_36 = arith.constant 0 : index
    %59 = vector.load %arg8[%c0_34, %c0_35, %c0_36] : memref<1x2x16xf32, #tpu.memory_space<vmem>>, vector<1x2x16xf32>
    %60 = vector.shape_cast %59 : vector<1x2x16xf32> to vector<2x16xf32>
    %61 = vector.shape_cast %58 : vector<2x16xf32> to vector<1x2x16xf32>
    tpu.vector_store %arg8[%c0_34, %c0_35, %c0_36], %61 {strides = array<i32>} : memref<1x2x16xf32, #tpu.memory_space<vmem>>, vector<1x2x16xf32>,
    return
  }
  func.func @transform_0(%arg0: i32, %arg1: i32, %arg2: i32) -> (i32, i32, i32) {
    %c1_i32 = arith.constant 1 : i32
    %0 = arith.muli %arg0, %c1_i32 : i32
    %1 = arith.addi %0, %arg2 : i32
    %c0_i32 = arith.constant 0 : i32
    %c0_i32_0 = arith.constant 0 : i32
    return %arg1, %1, %c0_i32 : i32, i32, i32
  }
  func.func @transform_1(%arg0: i32, %arg1: i32, %arg2: i32) -> (i32, i32, i32, i32) {
    %c1_i32 = arith.constant 1 : i32
    %0 = arith.muli %arg0, %c1_i32 : i32
    %1 = arith.addi %0, %arg2 : i32
    %c0_i32 = arith.constant 0 : i32
    %c0_i32_0 = arith.constant 0 : i32
    %c0_i32_1 = arith.constant 0 : i32
    return %arg1, %c0_i32, %1, %c0_i32_0 : i32, i32, i32, i32
  }
  func.func @transform_2(%arg0: i32, %arg1: i32, %arg2: i32) -> (i32, i32, i32) {
    %c0_i32 = arith.constant 0 : i32
    %c0_i32_0 = arith.constant 0 : i32
    return %arg0, %arg1, %c0_i32 : i32, i32, i32
  }
  func.func @transform_3(%arg0: i32, %arg1: i32, %arg2: i32) -> (i32, i32, i32) {
    %c0_i32 = arith.constant 0 : i32
    %c0_i32_0 = arith.constant 0 : i32
    return %arg0, %arg1, %c0_i32 : i32, i32, i32
  }
  func.func @transform_4(%arg0: i32, %arg1: i32, %arg2: i32) -> (i32, i32, i32) {
    %c0_i32 = arith.constant 0 : i32
    %c0_i32_0 = arith.constant 0 : i32
    return %arg0, %arg1, %c0_i32 : i32, i32, i32
  }
  func.func @transform_5(%arg0: i32, %arg1: i32, %arg2: i32) -> (i32, i32, i32) {
    %c0_i32 = arith.constant 0 : i32
    %c0_i32_0 = arith.constant 0 : i32
    return %arg0, %arg1, %c0_i32 : i32, i32, i32
  }
}

</mosaic_0001>

<llo_original>
// kernel: tpu_custom_call.1
$region0: #{tpu_custom_call.1}
  #allocation0 [shape = 'u32[]', space=smem, size = 0x4, offset = 0x4, fixed_abs, tag = 'smem constant byte address 0x4 - core index']
  #allocation1 [shape = 'u32[144,128]{1,0:T(1,128)}', space=vmem, size = 0x12000, scoped, tag = 'internal scratch']
  %s0 = inlined_call_operand.hbm [shape: f32[2,16,16], index: 0, kind: input, shape index: {}]
  %s1 = inlined_call_operand.hbm [shape: f32[2,2,16,16], index: 1, kind: input, shape index: {}]
  %s2 = inlined_call_operand.hbm [shape: f32[2,2,16], index: 2, kind: output, shape index: {0}]
  %s3 = inlined_call_operand.hbm [shape: f32[2,2,16], index: 3, kind: output, shape index: {1}]
  %s4 = inlined_call_operand.hbm [shape: f32[2,2,16], index: 4, kind: output, shape index: {2}]
  %s5 = inlined_call_operand.hbm [shape: f32[2,2,16], index: 5, kind: output, shape index: {3}]
  %6 = xla_tuple %s2, %s3, %s4, %s5
  %s7 = sld [smem:[#allocation0]]
  $region77: #{tpu_custom_call.1} parent=0
    _
  %s9 = ssub.s32 1, %s7
  %s10 = scalar_select 0, %s9, %s7
  $region1: #{tpu_custom_call.1} parent=0
    #allocation2 [shape = 'u8[16384]{0}', space=vmem, size = 0x4000, scoped, tag = 'input window, operand 0']
    #allocation3 [shape = 's32[2]{0}', space=sflag, size = 0x8, scoped, tag = 'scoped memory for tpu_custom_call.1']
    #allocation4 [shape = 's32[2]{0}', space=sflag, size = 0x8, scoped, tag = 'scoped memory for tpu_custom_call.1']
    #allocation5 [shape = 'u8[32768]{0}', space=vmem, size = 0x8000, scoped, tag = 'input window, operand 1']
    #allocation6 [shape = 's32[2]{0}', space=sflag, size = 0x8, scoped, tag = 'scoped memory for tpu_custom_call.1']
    #allocation7 [shape = 'u8[2048]{0}', space=vmem, size = 0x800, scoped, tag = 'output window, operand 0']
    #allocation8 [shape = 'u8[2048]{0}', space=vmem, size = 0x800, scoped, tag = 'output window, operand 1']
    #allocation9 [shape = 's32[2]{0}', space=sflag, size = 0x8, scoped, tag = 'scoped memory for tpu_custom_call.1']
    #allocation10 [shape = 'u8[2048]{0}', space=vmem, size = 0x800, scoped, tag = 'output window, operand 2']
    #allocation11 [shape = 'u8[2048]{0}', space=vmem, size = 0x800, scoped, tag = 'output window, operand 3']
    #allocation12 [shape = 's32[2]{0}', space=sflag, size = 0x8, scoped, tag = 'scoped memory for tpu_custom_call.1']
    %11 = vsyncpa [#allocation3], 0
    %s12 = scalar_lea.sflag [#allocation3], 1
    %13 = vsyncpa %s12, 0
    %14 = vsyncpa [#allocation6], 0
    %s15 = scalar_lea.sflag [#allocation6], 1
    %16 = vsyncpa %s15, 0
    %17 = vsyncpa [#allocation4], 0
    %s18 = scalar_lea.sflag [#allocation4], 1
    %19 = vsyncpa %s18, 0
    %20 = vsyncpa [#allocation9], 0
    %s21 = scalar_lea.sflag [#allocation9], 1
    %22 = vsyncpa %s21, 0
    %23 = vsyncpa [#allocation12], 0
    %s24 = scalar_lea.sflag [#allocation12], 1
    %25 = vsyncpa %s24, 0
    loop: start=0, step=1, limit=4
    $region2: #{tpu_custom_call.1} parent=1 // loop_pre_header
      _
    $region3: #{tpu_custom_call.1} parent=1 // loop_header
      %s27 = sphi 0, %s31
      %p28 = scmp.ge.s32.totalorder %s27, 4
      %s34 = sphi 0, %s53
      %s35 = sphi 0, %s49
      %s36 = sphi 0, %s45
      %s37 = sphi 0, %s34
      %s38 = sphi 0, %s35
      %s39 = sphi 0, %s36
      %s40 = sphi 0, %s37
      %s41 = sphi 0, %s38
      %s42 = sphi 0, %s39
      %s60 = sphi 0, %s62
      %s63 = sphi 0, %s60
      %s64 = sphi 0, %s63
      %s80 = sphi 0, %s64
      %s90 = sphi 0, %s92
      %s93 = sphi 0, %s90
      %s94 = sphi 0, %s93
      %s110 = sphi 0, %s94
      %s118 = sphi 0, %s120
      %s121 = sphi 0, %s118
      %s122 = sphi 0, %s121
      %s138 = sphi 0, %s122
      %s146 = sphi 0, %s148
      %s149 = sphi 0, %s146
      %s150 = sphi 0, %s149
      %s166 = sphi 0, %s150
      %s174 = sphi 0, %s176
      %s177 = sphi 0, %s174
      %s178 = sphi 0, %s177
      %s194 = sphi 0, %s178
      %s202 = sphi 0, %s204
      %s205 = sphi 0, %s202
      %s206 = sphi 0, %s205
      %s222 = sphi 0, %s206
    $region4: #{tpu_custom_call.1} parent=1 // loop_header_branch
      %30 = sbr.rel (%p28) target = $region8
    $region5: #{tpu_custom_call.1} parent=1 // loop_body
      %s32 = ssub.s32 %s27, 1
      %s33 = ssub.s32 %s27, 2
      %s43 = sadd.s32 1, %s36
      %p44 = scmp.ge.s32.totalorder %s43, 1
      %s45 = scalar_select %p44, 0, %s43
      %s46 = sadd.s32 1, %s35
      %s47 = scalar_select %p44, %s46, %s35
      %p48 = scmp.ge.s32.totalorder %s47, 1
      %s49 = scalar_select %p48, 0, %s47
      %s50 = sadd.s32 1, %s34
      %s51 = scalar_select %p48, %s50, %s34
      %p52 = scmp.ge.s32.totalorder %s51, 2
      %s53 = scalar_select %p52, 0, %s51
      %s54 = sadd.s32 %s34, %s36
      %s55 = sadd.s32 %s53, %s45
      %s56 = ssub.s32 %s35, %s49
      %s57 = ssub.s32 %s54, %s55
      %s58 = sor.u32 %s56, %s57
      %p59 = scmp.eq.s32.totalorder %s58, 0
      %s61 = sadd.s32 %s60, 1
      %s62 = scalar_select %p59, %s60, %s61
      %p65 = pneg %p59
      %p66 = scmp.eq.s32.totalorder %s27, 1
      %p67 = por %p65, %p66
      %p68 = scmp.ne.s32.totalorder %s60, %s63
      %p69 = scmp.eq.s32.totalorder %s27, 0
      %p70 = por %p68, %p69
      %p71 = scmp.ne.s32.totalorder %s60, %s63
      %p72 = scmp.eq.s32.totalorder %s32, 1
      %p73 = por %p71, %p72
      %p74 = scmp.ne.s32.totalorder %s63, %s64
      %p75 = scmp.eq.s32.totalorder %s32, 0
      %p76 = por %p74, %p75
      %p77 = scmp.ne.s32.totalorder %s63, %s64
      %p78 = scmp.eq.s32.totalorder %s33, 1
      %p79 = por %p77, %p78
      %p81 = scmp.ne.s32.totalorder %s64, %s80
      %p82 = scmp.eq.s32.totalorder %s33, 0
      %p83 = por %p81, %p82
      %s84 = sadd.s32 %s34, %s36
      %s85 = sadd.s32 %s53, %s45
      %s86 = ssub.s32 %s35, %s49
      %s87 = ssub.s32 %s84, %s85
      %s88 = sor.u32 %s86, %s87
      %p89 = scmp.eq.s32.totalorder %s88, 0
      %s91 = sadd.s32 %s90, 1
      %s92 = scalar_select %p89, %s90, %s91
      %p95 = pneg %p89
      %p96 = scmp.eq.s32.totalorder %s27, 1
      %p97 = por %p95, %p96
      %p98 = scmp.ne.s32.totalorder %s90, %s93
      %p99 = scmp.eq.s32.totalorder %s27, 0
      %p100 = por %p98, %p99
      %p101 = scmp.ne.s32.totalorder %s90, %s93
      %p102 = scmp.eq.s32.totalorder %s32, 1
      %p103 = por %p101, %p102
      %p104 = scmp.ne.s32.totalorder %s93, %s94
      %p105 = scmp.eq.s32.totalorder %s32, 0
      %p106 = por %p104, %p105
      %p107 = scmp.ne.s32.totalorder %s93, %s94
      %p108 = scmp.eq.s32.totalorder %s33, 1
      %p109 = por %p107, %p108
      %p111 = scmp.ne.s32.totalorder %s94, %s110
      %p112 = scmp.eq.s32.totalorder %s33, 0
      %p113 = por %p111, %p112
      %s114 = ssub.s32 %s34, %s53
      %s115 = ssub.s32 %s35, %s49
      %s116 = sor.u32 %s114, %s115
      %p117 = scmp.eq.s32.totalorder %s116, 0
      %s119 = sadd.s32 %s118, 1
      %s120 = scalar_select %p117, %s118, %s119
      %p123 = pneg %p117
      %p124 = scmp.eq.s32.totalorder %s27, 1
      %p125 = por %p123, %p124
      %p126 = scmp.ne.s32.totalorder %s118, %s121
      %p127 = scmp.eq.s32.totalorder %s27, 0
      %p128 = por %p126, %p127
      %p129 = scmp.ne.s32.totalorder %s118, %s121
      %p130 = scmp.eq.s32.totalorder %s32, 1
      %p131 = por %p129, %p130
      %p132 = scmp.ne.s32.totalorder %s121, %s122
      %p133 = scmp.eq.s32.totalorder %s32, 0
      %p134 = por %p132, %p133
      %p135 = scmp.ne.s32.totalorder %s121, %s122
      %p136 = scmp.eq.s32.totalorder %s33, 1
      %p137 = por %p135, %p136
      %p139 = scmp.ne.s32.totalorder %s122, %s138
      %p140 = scmp.eq.s32.totalorder %s33, 0
      %p141 = por %p139, %p140
      %s142 = ssub.s32 %s34, %s53
      %s143 = ssub.s32 %s35, %s49
      %s144 = sor.u32 %s142, %s143
      %p145 = scmp.eq.s32.totalorder %s144, 0
      %s147 = sadd.s32 %s146, 1
      %s148 = scalar_select %p145, %s146, %s147
      %p151 = pneg %p145
      %p152 = scmp.eq.s32.totalorder %s27, 1
      %p153 = por %p151, %p152
      %p154 = scmp.ne.s32.totalorder %s146, %s149
      %p155 = scmp.eq.s32.totalorder %s27, 0
      %p156 = por %p154, %p155
      %p157 = scmp.ne.s32.totalorder %s146, %s149
      %p158 = scmp.eq.s32.totalorder %s32, 1
      %p159 = por %p157, %p158
      %p160 = scmp.ne.s32.totalorder %s149, %s150
      %p161 = scmp.eq.s32.totalorder %s32, 0
      %p162 = por %p160, %p161
      %p163 = scmp.ne.s32.totalorder %s149, %s150
      %p164 = scmp.eq.s32.totalorder %s33, 1
      %p165 = por %p163, %p164
      %p167 = scmp.ne.s32.totalorder %s150, %s166
      %p168 = scmp.eq.s32.totalorder %s33, 0
      %p169 = por %p167, %p168
      %s170 = ssub.s32 %s34, %s53
      %s171 = ssub.s32 %s35, %s49
      %s172 = sor.u32 %s170, %s171
      %p173 = scmp.eq.s32.totalorder %s172, 0
      %s175 = sadd.s32 %s174, 1
      %s176 = scalar_select %p173, %s174, %s175
      %p179 = pneg %p173
      %p180 = scmp.eq.s32.totalorder %s27, 1
      %p181 = por %p179, %p180
      %p182 = scmp.ne.s32.totalorder %s174, %s177
      %p183 = scmp.eq.s32.totalorder %s27, 0
      %p184 = por %p182, %p183
      %p185 = scmp.ne.s32.totalorder %s174, %s177
      %p186 = scmp.eq.s32.totalorder %s32, 1
      %p187 = por %p185, %p186
      %p188 = scmp.ne.s32.totalorder %s177, %s178
      %p189 = scmp.eq.s32.totalorder %s32, 0
      %p190 = por %p188, %p189
      %p191 = scmp.ne.s32.totalorder %s177, %s178
      %p192 = scmp.eq.s32.totalorder %s33, 1
      %p193 = por %p191, %p192
      %p195 = scmp.ne.s32.totalorder %s178, %s194
      %p196 = scmp.eq.s32.totalorder %s33, 0
      %p197 = por %p195, %p196
      %s198 = ssub.s32 %s34, %s53
      %s199 = ssub.s32 %s35, %s49
      %s200 = sor.u32 %s198, %s199
      %p201 = scmp.eq.s32.totalorder %s200, 0
      %s203 = sadd.s32 %s202, 1
      %s204 = scalar_select %p201, %s202, %s203
      %p207 = pneg %p201
      %p208 = scmp.eq.s32.totalorder %s27, 1
      %p209 = por %p207, %p208
      %p210 = scmp.ne.s32.totalorder %s202, %s205
      %p211 = scmp.eq.s32.totalorder %s27, 0
      %p212 = por %p210, %p211
      %p213 = scmp.ne.s32.totalorder %s202, %s205
      %p214 = scmp.eq.s32.totalorder %s32, 1
      %p215 = por %p213, %p214
      %p216 = scmp.ne.s32.totalorder %s205, %s206
      %p217 = scmp.eq.s32.totalorder %s32, 0
      %p218 = por %p216, %p217
      %p219 = scmp.ne.s32.totalorder %s205, %s206
      %p220 = scmp.eq.s32.totalorder %s33, 1
      %p221 = por %p219, %p220
      %p223 = scmp.ne.s32.totalorder %s206, %s222
      %p224 = scmp.eq.s32.totalorder %s33, 0
      %p225 = por %p223, %p224
      %p226 = scmp.le.s32.totalorder 1, %s27
      %p227 = scmp.lt.s32.totalorder %s27, 3
      %p228 = pnand %p226, %p227
      %p229 = pneg %p228
      // Predicated region
      $region9: #{tpu_custom_call.1} parent=5 // pred_check
        _
      $region10: #{tpu_custom_call.1} parent=5 // pred_check_branch
        %231 = sbr.rel (%p228) target = $region12
      $region11: #{tpu_custom_call.1} parent=5 // pred_region
        %s232 = ssub.s32 %s27, 1
      $region12: #{tpu_custom_call.1} parent=5 // pred_fallthru
        _
      %p233 = scmp.lt.s32.totalorder %s27, 2
      // Predicated region
      $region13: #{tpu_custom_call.1} parent=5 // pred_check
        %p234 = pneg %p233
      $region14: #{tpu_custom_call.1} parent=5 // pred_check_branch
        %236 = sbr.rel (%p234) target = $region16
      $region15: #{tpu_custom_call.1} parent=5 // pred_region
        // Predicated region
        $region17: #{tpu_custom_call.1} parent=15 // pred_check
          %p237 = pneg %p70
        $region18: #{tpu_custom_call.1} parent=15 // pred_check_branch
          %239 = sbr.rel (%p237) target = $region20
        $region19: #{tpu_custom_call.1} parent=15 // pred_region
          %s240 = sand.u32 %s60, 1
          %s241 = scalar_lea.sflag [#allocation3], %s240
          %s242 = sand.u32 %s60, 1
          %s243 = smul.addr %s242, 16
          %s244 = scalar_lea.vmem [#allocation2], %s243
          %s245 = sadd.s32 %s34, %s36
          %s246 = smul.u32 2, %s35
          %s248 = ssub.s32 256, 256
          %249 = vsyncadd %s241, %s248
          %s250 = smul.addr %s246, 2
          %s251 = sadd.s32 %s245, %s250
          %s252 = smul.addr %s251, 128
          %s253 = scalar_lea.hbm %s0, %s252
          %s254 = sshll.u32 %s244, 4
          %s255 = int_to_ptr.vmem [resolvable:$true] %s254
          %260 = dma.hbm_to_vmem [thread:$0]  %s253, 256, %s255, %s241, 256, 128, 8
        $region20: #{tpu_custom_call.1} parent=15 // pred_fallthru
          _
        // Predicated region
        $region21: #{tpu_custom_call.1} parent=15 // pred_check
          %p261 = pneg %p100
        $region22: #{tpu_custom_call.1} parent=15 // pred_check_branch
          %263 = sbr.rel (%p261) target = $region24
        $region23: #{tpu_custom_call.1} parent=15 // pred_region
          %s264 = sand.u32 %s90, 1
          %s265 = scalar_lea.sflag [#allocation6], %s264
          %s266 = sand.u32 %s90, 1
          %s267 = smul.addr %s266, 32
          %s268 = scalar_lea.vmem [#allocation5], %s267
          %s269 = sadd.s32 %s34, %s36
          %s270 = smul.u32 2, %s35
          %s272 = ssub.s32 512, 512
          %273 = vsyncadd %s265, %s272
          %s274 = smul.addr %s270, 4
          %s275 = sadd.s32 %s269, %s274
          %s276 = smul.addr %s275, 128
          %s277 = scalar_lea.hbm %s1, %s276
          %s278 = sshll.u32 %s268, 4
          %s279 = int_to_ptr.vmem [resolvable:$true] %s278
          %284 = dma.hbm_to_vmem [thread:$0]  %s277, 512, %s279, %s265, 256, 128, 8
        $region24: #{tpu_custom_call.1} parent=15 // pred_fallthru
          _
      $region16: #{tpu_custom_call.1} parent=5 // pred_fallthru
        _
      %p285 = scmp.le.s32.totalorder 1, %s27
      %p286 = scmp.lt.s32.totalorder %s27, 3
      %p287 = pnand %p285, %p286
      %p288 = pneg %p287
      // Predicated region
      $region25: #{tpu_custom_call.1} parent=5 // pred_check
        _
      $region26: #{tpu_custom_call.1} parent=5 // pred_check_branch
        %290 = sbr.rel (%p287) target = $region28
      $region27: #{tpu_custom_call.1} parent=5 // pred_region
        %s291 = ssub.s32 %s27, 1
        %s292 = sand.u32 %s63, 1
        %s293 = scalar_lea.sflag [#allocation3], %s292
        %s294 = sand.u32 %s63, 1
        %s295 = smul.addr %s294, 16
        %s296 = scalar_lea.vmem [#allocation2], %s295
        // Predicated region
        $region29: #{tpu_custom_call.1} parent=27 // pred_check
          %p297 = pneg %p76
        $region30: #{tpu_custom_call.1} parent=27 // pred_check_branch
          %299 = sbr.rel (%p297) target = $region32
        $region31: #{tpu_custom_call.1} parent=27 // pred_region
          %300 = dma.done %s293, 256
        $region32: #{tpu_custom_call.1} parent=27 // pred_fallthru
          _
        %s301 = sand.u32 %s93, 1
        %s302 = scalar_lea.sflag [#allocation6], %s301
        %s303 = sand.u32 %s93, 1
        %s304 = smul.addr %s303, 32
        %s305 = scalar_lea.vmem [#allocation5], %s304
        // Predicated region
        $region33: #{tpu_custom_call.1} parent=27 // pred_check
          %p306 = pneg %p106
        $region34: #{tpu_custom_call.1} parent=27 // pred_check_branch
          %308 = sbr.rel (%p306) target = $region36
        $region35: #{tpu_custom_call.1} parent=27 // pred_region
          %309 = dma.done %s302, 512
        $region36: #{tpu_custom_call.1} parent=27 // pred_fallthru
          _
        %s310 = sand.u32 %s63, 1
        %s311 = scalar_lea.sflag [#allocation3], %s310
        %s312 = sand.u32 %s63, 1
        %s313 = smul.addr %s312, 16
        %s314 = scalar_lea.vmem [#allocation2], %s313
        %p315 = pneg %p76
        %p316 = pneg %p73
        %s317 = sand.u32 %s93, 1
        %s318 = scalar_lea.sflag [#allocation6], %s317
        %s319 = sand.u32 %s93, 1
        %s320 = smul.addr %s319, 32
        %s321 = scalar_lea.vmem [#allocation5], %s320
        %p322 = pneg %p106
        %p323 = pneg %p103
        %p324 = pneg %p134
        %p325 = pneg %p131
        %s326 = sand.u32 %s121, 1
        %s327 = scalar_lea.sflag [#allocation4], %s326
        %s328 = sand.u32 %s121, 1
        %s329 = smul.addr %s328, 2
        %s330 = scalar_lea.vmem [#allocation7], %s329
        %p331 = pneg %p162
        %p332 = pneg %p159
        %s333 = sand.u32 %s32, 1
        %s334 = scalar_lea.sflag [#allocation9], %s333
        %s335 = sand.u32 %s149, 1
        %s336 = smul.addr %s335, 2
        %s337 = scalar_lea.vmem [#allocation8], %s336
        %p338 = pneg %p190
        %p339 = pneg %p187
        %s340 = sand.u32 %s32, 1
        %s341 = scalar_lea.sflag [#allocation9], %s340
        %s342 = sand.u32 %s177, 1
        %s343 = smul.addr %s342, 2
        %s344 = scalar_lea.vmem [#allocation10], %s343
        %p345 = pneg %p218
        %p346 = pneg %p215
        %s347 = sand.u32 %s205, 1
        %s348 = scalar_lea.sflag [#allocation12], %s347
        %s349 = sand.u32 %s205, 1
        %s350 = smul.addr %s349, 2
        %s351 = scalar_lea.vmem [#allocation11], %s350
        %s352 = sadd.s32 %s37, %s39
        %s353 = smul.u32 2, %s38
        %s354 = sadd.s32 %s37, %s39
        %s355 = smul.u32 2, %s38
        %p356 = scmp.eq.s32.totalorder %s39, 0
        // Predicated region
        $region37: #{tpu_custom_call.1} parent=27 // pred_check
          %p357 = pneg %p356
        $region38: #{tpu_custom_call.1} parent=27 // pred_check_branch
          %359 = sbr.rel (%p357) target = $region40
        $region39: #{tpu_custom_call.1} parent=27 // pred_region
          %vm360 = vcmask 123904
          %361 = vst.msk [vmem:[%s330] sm:$0x3] %vm360, -1e+30
          %362 = vst.msk [vmem:[%s337] sm:$0x3] %vm360, 0.0
          %363 = vst.msk [vmem:[%s344] sm:$0x3] %vm360, 0.0
          %364 = vst.msk [vmem:[%s351] sm:$0x3] %vm360, 0.0
        $region40: #{tpu_custom_call.1} parent=27 // pred_fallthru
          _
        %v365 = vld [vmem:[%s296] sm:$0xff]
        %v366 = vld [vmem:[%s296 + $0x8] sm:$0xff]
        %v367 = vld [vmem:[%s305] sm:$0xff]
        %v368 = vld [vmem:[%s305 + $0x10] sm:$0xff]
        %s369 = scalar_lea.vmem %s305, 8 [#allocation5]
        %v370 = vld [vmem:[%s369] sm:$0xff]
        %v371 = vld [vmem:[%s369 + $0x10] sm:$0xff]
        %s372 = sadd.s32 %s37, %s39
        %s373 = smul.u32 %s372, 8
        %v374 = vlaneseq
        %v375 = vshrl.u32 %v374, 7
        %v376 = vstv %s373
        %v377 = vadd.s32 %v375, %v376
        %v378 = vlaneseq
        %v379 = vand.u32 %v378, 127
        %v380 = vcvt.s32.f32 %v379
        %v381 = vcvt.s32.f32 %v377
        %v382 = vld [vmem:[%s330] sm:$0x3]
        %vm383 = vcmask 130048
        %v384 = vsel %vm383, %v365, -inf
        %v385 = vrot.slane %v384, 4
        %v386 = vmax.f32 %v384, %v385
        %v387 = vrot.slane %v386, 2
        %v388 = vmax.f32 %v386, %v387
        %v389 = vrot.slane %v388, 1
        %v390 = vmax.f32 %v388, %v389
        %v391 = vsel %vm383, %v366, -inf
        %v392 = vrot.slane %v391, 4
        %v393 = vmax.f32 %v391, %v392
        %v394 = vrot.slane %v393, 2
        %v395 = vmax.f32 %v393, %v394
        %v396 = vrot.slane %v395, 1
        %v397 = vmax.f32 %v395, %v396
        %vm400 = vcmask 1041409
        %v401 = vsel %vm400, %v397, %v390
        %v403 = vmax.f32 %v382, %v401
        %v404 = vsub.f32 %v382, %v403
        %v405 = vmul.f32 %v404, 1.442695
        %v406 = vpow.pop %v405
        %v409 = vunpack.c.l.s4 1966171168
        %v410 = vunpack.c.0.s8 %v409
        %v411 = vlaneseq
        %v412 = vshrl.u32 %v411, 7
        %v413 = vsub.s32 %v410, %v412
        %v414 = vrot.slane %v403, %v413
        %v415 = vcombine.high %v414, %v414
        %v417 = vunpack.c.l.s4 1966171168
        %v418 = vunpack.c.0.s8 %v417
        %v419 = vlaneseq
        %v420 = vshrl.u32 %v419, 7
        %v421 = vsub.s32 %v418, %v420
        %v422 = vrot.slane %v414, %v421
        %v424 = vunpack.c.l.s4 1966171168
        %v425 = vunpack.c.0.s8 %v424
        %v426 = vlaneseq
        %v427 = vshrl.u32 %v426, 7
        %v428 = vsub.s32 %v425, %v427
        %v429 = vrot.slane %v415, %v428
        %v430 = vlaneseq
        %v431 = vshrl.u32 %v430, 7
        %v432 = vsub.s32 0, %v431
        %v433 = vrot.slane %v422, %v432
        %v434 = vlaneseq
        %v435 = vshrl.u32 %v434, 7
        %v436 = vsub.s32 0, %v435
        %v437 = vrot.slane %v429, %v436
        %v440 = vsub.f32 %v365, %v433
        %v441 = vsub.f32 %v366, %v437
        %v442 = vmul.f32 %v440, 1.442695
        %v443 = vpow.pop %v442
        %v444 = vmul.f32 %v441, 1.442695
        %v445 = vpow.pop %v444
        %v446 = vadd.f32 %v380, %v367
        %v447 = vadd.f32 %v380, %v368
        %v448 = vmul.f32 %v443, %v446
        %v449 = vmul.f32 %v445, %v447
        %v450 = vadd.f32 %v381, %v370
        %v451 = vadd.f32 %v381, %v371
        %v452 = vmul.f32 %v443, %v450
        %v453 = vmul.f32 %v445, %v451
        %vm454 = vcmask 123904
        %455 = vst.msk [vmem:[%s330] sm:$0x3] %vm454, %v403
        %v456 = vld [vmem:[%s337] sm:$0x3]
        %v457 = vmul.f32 %v406, %v456
        %v458 = vsel %vm383, %v443, 0.0
        %v459 = vrot.slane %v458, 4
        %v460 = vadd.f32 %v458, %v459
        %v461 = vrot.slane %v460, 2
        %v462 = vadd.f32 %v460, %v461
        %v463 = vrot.slane %v462, 1
        %v464 = vadd.f32 %v462, %v463
        %v465 = vsel %vm383, %v445, 0.0
        %v466 = vrot.slane %v465, 4
        %v467 = vadd.f32 %v465, %v466
        %v468 = vrot.slane %v467, 2
        %v469 = vadd.f32 %v467, %v468
        %v470 = vrot.slane %v469, 1
        %v471 = vadd.f32 %v469, %v470
        %v474 = vsel %vm400, %v471, %v464
        %v476 = vadd.f32 %v457, %v474
        %477 = vst.msk [vmem:[%s337] sm:$0x3] %vm454, %v476
        %v478 = vld [vmem:[%s344] sm:$0x3]
        %v479 = vmul.f32 %v406, %v478
        %v480 = vsel %vm383, %v448, 0.0
        %v481 = vrot.slane %v480, 4
        %v482 = vadd.f32 %v480, %v481
        %v483 = vrot.slane %v482, 2
        %v484 = vadd.f32 %v482, %v483
        %v485 = vrot.slane %v484, 1
        %v486 = vadd.f32 %v484, %v485
        %v487 = vsel %vm383, %v449, 0.0
        %v488 = vrot.slane %v487, 4
        %v489 = vadd.f32 %v487, %v488
        %v490 = vrot.slane %v489, 2
        %v491 = vadd.f32 %v489, %v490
        %v492 = vrot.slane %v491, 1
        %v493 = vadd.f32 %v491, %v492
        %v496 = vsel %vm400, %v493, %v486
        %v498 = vadd.f32 %v479, %v496
        %499 = vst.msk [vmem:[%s344] sm:$0x3] %vm454, %v498
        %v500 = vld [vmem:[%s351] sm:$0x3]
        %v501 = vmul.f32 %v406, %v500
        %v502 = vsel %vm383, %v452, 0.0
        %v503 = vrot.slane %v502, 4
        %v504 = vadd.f32 %v502, %v503
        %v505 = vrot.slane %v504, 2
        %v506 = vadd.f32 %v504, %v505
        %v507 = vrot.slane %v506, 1
        %v508 = vadd.f32 %v506, %v507
        %v509 = vsel %vm383, %v453, 0.0
        %v510 = vrot.slane %v509, 4
        %v511 = vadd.f32 %v509, %v510
        %v512 = vrot.slane %v511, 2
        %v513 = vadd.f32 %v511, %v512
        %v514 = vrot.slane %v513, 1
        %v515 = vadd.f32 %v513, %v514
        %v518 = vsel %vm400, %v515, %v508
        %v520 = vadd.f32 %v501, %v518
        %521 = vst.msk [vmem:[%s351] sm:$0x3] %vm454, %v520
        %s522 = sand.u32 %s121, 1
        %s523 = scalar_lea.sflag [#allocation4], %s522
        %s524 = sand.u32 %s121, 1
        %s525 = smul.addr %s524, 2
        %s526 = scalar_lea.vmem [#allocation7], %s525
        %s527 = sand.u32 %s32, 1
        %s528 = scalar_lea.sflag [#allocation9], %s527
        %s529 = sand.u32 %s149, 1
        %s530 = smul.addr %s529, 2
        %s531 = scalar_lea.vmem [#allocation8], %s530
        %s532 = sand.u32 %s32, 1
        %s533 = scalar_lea.sflag [#allocation9], %s532
        %s534 = sand.u32 %s177, 1
        %s535 = smul.addr %s534, 2
        %s536 = scalar_lea.vmem [#allocation10], %s535
        %s537 = sand.u32 %s205, 1
        %s538 = scalar_lea.sflag [#allocation12], %s537
        %s539 = sand.u32 %s205, 1
        %s540 = smul.addr %s539, 2
        %s541 = scalar_lea.vmem [#allocation11], %s540
        // Predicated region
        $region41: #{tpu_custom_call.1} parent=27 // pred_check
          %p542 = pneg %p131
        $region42: #{tpu_custom_call.1} parent=27 // pred_check_branch
          %544 = sbr.rel (%p542) target = $region44
        $region43: #{tpu_custom_call.1} parent=27 // pred_region
          %s546 = ssub.s32 32, 32
          %547 = vsyncadd %s523, %s546
          %s548 = sadd.s32 %s38, %s37
          %s549 = smul.addr %s548, 32
          %s550 = scalar_lea.hbm %s2, %s549
          %s552 = sshll.u32 %s526, 4
          %s553 = int_to_ptr.vmem [resolvable:$true] %s552
          %555 = dma.vmem_to_hbm [thread:$0]  %s553, 32, %s550, %s523
        $region44: #{tpu_custom_call.1} parent=27 // pred_fallthru
          _
        // Predicated region
        $region45: #{tpu_custom_call.1} parent=27 // pred_check
          %p556 = pneg %p159
        $region46: #{tpu_custom_call.1} parent=27 // pred_check_branch
          %558 = sbr.rel (%p556) target = $region48
        $region47: #{tpu_custom_call.1} parent=27 // pred_region
          %s560 = ssub.s32 32, 32
          %561 = vsyncadd %s528, %s560
          %s562 = sadd.s32 %s38, %s37
          %s563 = smul.addr %s562, 32
          %s564 = scalar_lea.hbm %s3, %s563
          %s566 = sshll.u32 %s531, 4
          %s567 = int_to_ptr.vmem [resolvable:$true] %s566
          %569 = dma.vmem_to_hbm [thread:$0]  %s567, 32, %s564, %s528
        $region48: #{tpu_custom_call.1} parent=27 // pred_fallthru
          _
        // Predicated region
        $region49: #{tpu_custom_call.1} parent=27 // pred_check
          %p570 = pneg %p187
        $region50: #{tpu_custom_call.1} parent=27 // pred_check_branch
          %572 = sbr.rel (%p570) target = $region52
        $region51: #{tpu_custom_call.1} parent=27 // pred_region
          %s574 = ssub.s32 32, 32
          %575 = vsyncadd %s533, %s574
          %s576 = sadd.s32 %s38, %s37
          %s577 = smul.addr %s576, 32
          %s578 = scalar_lea.hbm %s4, %s577
          %s580 = sshll.u32 %s536, 4
          %s581 = int_to_ptr.vmem [resolvable:$true] %s580
          %583 = dma.vmem_to_hbm [thread:$0]  %s581, 32, %s578, %s533
        $region52: #{tpu_custom_call.1} parent=27 // pred_fallthru
          _
        // Predicated region
        $region53: #{tpu_custom_call.1} parent=27 // pred_check
          %p584 = pneg %p215
        $region54: #{tpu_custom_call.1} parent=27 // pred_check_branch
          %586 = sbr.rel (%p584) target = $region56
        $region55: #{tpu_custom_call.1} parent=27 // pred_region
          %s588 = ssub.s32 32, 32
          %589 = vsyncadd %s538, %s588
          %s590 = sadd.s32 %s38, %s37
          %s591 = smul.addr %s590, 32
          %s592 = scalar_lea.hbm %s5, %s591
          %s594 = sshll.u32 %s541, 4
          %s595 = int_to_ptr.vmem [resolvable:$true] %s594
          %597 = dma.vmem_to_hbm [thread:$0]  %s595, 32, %s592, %s538
        $region56: #{tpu_custom_call.1} parent=27 // pred_fallthru
          _
      $region28: #{tpu_custom_call.1} parent=5 // pred_fallthru
        _
      %p598 = scmp.le.s32.totalorder 2, %s27
      // Predicated region
      $region57: #{tpu_custom_call.1} parent=5 // pred_check
        %p599 = pneg %p598
      $region58: #{tpu_custom_call.1} parent=5 // pred_check_branch
        %601 = sbr.rel (%p599) target = $region60
      $region59: #{tpu_custom_call.1} parent=5 // pred_region
        %s602 = ssub.s32 %s27, 2
        // Predicated region
        $region61: #{tpu_custom_call.1} parent=59 // pred_check
          %p603 = pneg %p137
        $region62: #{tpu_custom_call.1} parent=59 // pred_check_branch
          %605 = sbr.rel (%p603) target = $region64
        $region63: #{tpu_custom_call.1} parent=59 // pred_region
          %s606 = sand.u32 %s122, 1
          %s607 = scalar_lea.sflag [#allocation4], %s606
          %s608 = sand.u32 %s122, 1
          %s609 = smul.addr %s608, 2
          %s610 = scalar_lea.vmem [#allocation7], %s609
          %611 = dma.done %s607, 32
        $region64: #{tpu_custom_call.1} parent=59 // pred_fallthru
          _
        // Predicated region
        $region65: #{tpu_custom_call.1} parent=59 // pred_check
          %p612 = pneg %p165
        $region66: #{tpu_custom_call.1} parent=59 // pred_check_branch
          %614 = sbr.rel (%p612) target = $region68
        $region67: #{tpu_custom_call.1} parent=59 // pred_region
          %s615 = sand.u32 %s33, 1
          %s616 = scalar_lea.sflag [#allocation9], %s615
          %s617 = sand.u32 %s150, 1
          %s618 = smul.addr %s617, 2
          %s619 = scalar_lea.vmem [#allocation8], %s618
          %620 = dma.done %s616, 32
        $region68: #{tpu_custom_call.1} parent=59 // pred_fallthru
          _
        // Predicated region
        $region69: #{tpu_custom_call.1} parent=59 // pred_check
          %p621 = pneg %p193
        $region70: #{tpu_custom_call.1} parent=59 // pred_check_branch
          %623 = sbr.rel (%p621) target = $region72
        $region71: #{tpu_custom_call.1} parent=59 // pred_region
          %s624 = sand.u32 %s33, 1
          %s625 = scalar_lea.sflag [#allocation9], %s624
          %s626 = sand.u32 %s178, 1
          %s627 = smul.addr %s626, 2
          %s628 = scalar_lea.vmem [#allocation10], %s627
          %629 = dma.done %s625, 32
        $region72: #{tpu_custom_call.1} parent=59 // pred_fallthru
          _
        // Predicated region
        $region73: #{tpu_custom_call.1} parent=59 // pred_check
          %p630 = pneg %p221
        $region74: #{tpu_custom_call.1} parent=59 // pred_check_branch
          %632 = sbr.rel (%p630) target = $region76
        $region75: #{tpu_custom_call.1} parent=59 // pred_region
          %s633 = sand.u32 %s206, 1
          %s634 = scalar_lea.sflag [#allocation12], %s633
          %s635 = sand.u32 %s206, 1
          %s636 = smul.addr %s635, 2
          %s637 = scalar_lea.vmem [#allocation11], %s636
          %638 = dma.done %s634, 32
        $region76: #{tpu_custom_call.1} parent=59 // pred_fallthru
          _
      $region60: #{tpu_custom_call.1} parent=5 // pred_fallthru
        _
    $region6: #{tpu_custom_call.1} parent=1 // loop_footer
      %s31 = sadd.s32 1, %s27
    $region7: #{tpu_custom_call.1} parent=1 // loop_footer_branch
      %26 = sbr.rel target = $region3
    $region8: #{tpu_custom_call.1} parent=1 // loop_exit
      _
    %639 = vsyncpa [#allocation3], 1
    %s640 = scalar_lea.sflag [#allocation3], 1
    %641 = vsyncpa %s640, 1
    %642 = vsyncpa [#allocation6], 1
    %s643 = scalar_lea.sflag [#allocation6], 1
    %644 = vsyncpa %s643, 1
    %645 = vsyncpa [#allocation4], 1
    %s646 = scalar_lea.sflag [#allocation4], 1
    %647 = vsyncpa %s646, 1
    %648 = vsyncpa [#allocation9], 1
    %s649 = scalar_lea.sflag [#allocation9], 1
    %650 = vsyncpa %s649, 1
    %651 = vsyncpa [#allocation12], 1
    %s652 = scalar_lea.sflag [#allocation12], 1
    %653 = vsyncpa %s652, 1

</llo_original>
